<compile_context>
chip_gen: v7x
topology: tpu7x:2x2x1
jax: 0.10.0
libtpu: 0.0.40
codegen_flags: <defaults>
</compile_context>

<pallas_src>
import functools

import jax
import jax.numpy as jnp
from jax.experimental import pallas as pl
from jax.experimental.pallas import tpu as pltpu

_LANE = 128


def _round_up(v, m):
    return (v + m - 1) // m * m


# ----------------------------------------------------------------------------- kernels ---


def _scse_fused_kernel(x_ref, w1_ref, b1_ref, w2_ref, b2_ref, ws_ref, bs_ref, o_ref, *, inv_hw):
    """Single-pass path: one (C, HWp) batch slab resident in VMEM; x read from HBM once."""
    x = x_ref[...].astype(jnp.float32)                                           # (C, HWp)
    # cSE: global average pool (padded lanes are zero; inv_hw uses the true HW).
    mean = jnp.sum(x, axis=1, keepdims=True) * inv_hw                            # (C, 1)
    h = jnp.dot(w1_ref[...], mean, preferred_element_type=jnp.float32) + b1_ref[...]
    h = jnp.maximum(h, 0.0)                                                      # (Cr, 1)
    c_gate = jax.nn.sigmoid(
        jnp.dot(w2_ref[...], h, preferred_element_type=jnp.float32) + b2_ref[...])  # (C, 1)
    # sSE: per-lane VPU multiply + sublane reduce (no M=1 MXU matmul on the critical path).
    s_gate = jax.nn.sigmoid(jnp.sum(x * ws_ref[...], axis=0, keepdims=True) + bs_ref[...])
    # x*cSE(x) + x*sSE(x) == x*(c_gate + s_gate): a single VPU broadcast-multiply.
    o_ref[...] = (x * (c_gate + s_gate)).astype(o_ref.dtype)


def _spatial_sum_kernel(x_ref, s_ref):
    """Two-pass path, pass 1: partial spatial sums; accumulator-in-output over tile axis."""
    t = pl.program_id(2)

    @pl.when(t == 0)
    def _():
        s_ref[...] = jnp.zeros_like(s_ref)

    # Sublane-wise reduce of this lane tile on the XLU.
    s_ref[...] += jnp.sum(x_ref[...].astype(jnp.float32), axis=1, keepdims=True)


def _scse_apply_kernel(x_ref, cg_ref, ws_ref, bs_ref, o_ref):
    """Two-pass path, pass 2: elementwise gating of one (C, HW_TILE) lane tile."""
    x = x_ref[...].astype(jnp.float32)                                           # (C, T)
    s_gate = jax.nn.sigmoid(jnp.sum(x * ws_ref[...], axis=0, keepdims=True) + bs_ref[...])
    o_ref[...] = (x * (cg_ref[...] + s_gate)).astype(o_ref.dtype)


# ----------------------------------------------------------------------------- wrapper ---


def _vmem_limit_bytes():
    """Scoped-VMEM limit derived from the actual chip (v5e/v6e: 128 MiB, v7x: 64 MiB)."""
    try:
        phys = pltpu.get_tpu_info().vmem_capacity_bytes
    except Exception:
        phys = 64 * 1024 * 1024  # conservative (v7x-sized) fallback
    return int(min(phys // 2, 64 * 1024 * 1024))


def _pick_hw_tile(hwp, c, itemsize, budget_bytes):
    """Largest lane tile that is a multiple of 128, divides hwp (already 128-aligned) and
    keeps one (C, tile) x block under `budget_bytes`."""
    max_lanes = max(_LANE, (budget_bytes // max(1, c * itemsize)) // _LANE * _LANE)
    tile = min(hwp, max_lanes)
    while hwp % tile != 0:
        tile -= _LANE
    return tile


def scse_pallas(x_nchw, params, *, hw_tile=None, force_two_pass=False, reduce_split=None):
    """x_nchw: (N, C, H, W). params: dict of weights (see init_params)."""
    w1, b1, w2, b2, ws, bs = (params[k] for k in ("w1", "b1", "w2", "b2", "ws", "bs"))
    N, C, H, W = x_nchw.shape
    HW = H * W
    Cr = w1.shape[0]
    itemsize = jnp.dtype(x_nchw.dtype).itemsize

    vmem_limit = _vmem_limit_bytes()
    # Pass-2 working set ~= 2x in-block + 2x out-block (+ tiny gates): leave headroom.
    tile_budget = max(512 * 1024, min(vmem_limit // 6, 12 * 1024 * 1024))

    # Lane-pad HW up to a multiple of 128: lane-dense (unmasked) stores and real
    # double-buffering. Zero padding does not perturb the spatial sum; padded output
    # lanes are sliced off below.
    HWp = _round_up(HW, _LANE)
    x3 = x_nchw.reshape(N, C, HW)
    if HWp != HW:
        x3 = jnp.pad(x3, ((0, 0), (0, 0), (0, HWp - HW)))

    ws_col = ws.reshape(C, 1)  # sSE weight as a column so the kernel uses VPU, not MXU
    inv_hw = 1.0 / HW

    slab_f32_bytes = C * HWp * 4
    use_fused = (not force_two_pass) and hw_tile is None and slab_f32_bytes * 8 <= vmem_limit

    if use_fused:
        # --- Fused single-pass: grid=(N,), one batch slab per step, x read once. ---
        out3 = pl.pallas_call(
            functools.partial(_scse_fused_kernel, inv_hw=inv_hw),
            out_shape=jax.ShapeDtypeStruct((N, C, HWp), x3.dtype),
            grid=(N,),
            in_specs=[
                pl.BlockSpec((pl.Squeezed(), C, HWp), lambda n: (n, 0, 0)),  # x slab
                pl.BlockSpec((Cr, C), lambda n: (0, 0)),                      # w1
                pl.BlockSpec((Cr, 1), lambda n: (0, 0)),                      # b1
                pl.BlockSpec((C, Cr), lambda n: (0, 0)),                      # w2
                pl.BlockSpec((C, 1), lambda n: (0, 0)),                       # b2
                pl.BlockSpec((C, 1), lambda n: (0, 0)),                       # ws (column)
                pl.BlockSpec((1, 1), lambda n: (0, 0)),                       # bs
            ],
            out_specs=pl.BlockSpec((pl.Squeezed(), C, HWp), lambda n: (n, 0, 0)),
            compiler_params=pltpu.CompilerParams(
                dimension_semantics=("parallel",),
                vmem_limit_bytes=vmem_limit,
            ),
        )(x3, w1, b1, w2, b2, ws_col, bs)
    else:
        # --- Two-pass path for large slabs. ---
        if hw_tile is None:
            hw_tile = _pick_hw_tile(HWp, C, itemsize, tile_budget)
        assert HWp % hw_tile == 0 and hw_tile % _LANE == 0
        n_tiles = HWp // hw_tile

        # Optional split of the reduction tile axis into per-core "parallel" chunks so a
        # single-batch global-average-pool still uses both TensorCores on v7x.
        n_split = reduce_split if reduce_split is not None else (2 if N < 2 else 1)
        if n_split < 1 or n_tiles % n_split != 0:
            n_split = 1
        tiles_per_split = n_tiles // n_split

        # Pass 1: per-(batch, split) partial channel sums over lane tiles.
        partial_sums = pl.pallas_call(
            _spatial_sum_kernel,
            out_shape=jax.ShapeDtypeStruct((N, n_split, C, 1), jnp.float32),
            grid=(N, n_split, tiles_per_split),
            in_specs=[
                pl.BlockSpec(
                    (pl.Squeezed(), C, hw_tile),
                    lambda n, s, t: (n, 0, s * tiles_per_split + t),
                ),
            ],
            out_specs=pl.BlockSpec(
                (pl.Squeezed(), pl.Squeezed(), C, 1), lambda n, s, t: (n, s, 0, 0)
            ),
            compiler_params=pltpu.CompilerParams(
                dimension_semantics=("parallel", "parallel", "arbitrary"),
                vmem_limit_bytes=vmem_limit,
            ),
        )(x3)

        # Tiny cSE MLP + sigmoid in plain JAX (hoisted out of the kernel epilogue: drops
        # the four weight operands from pass 1 and the 1-lane-wide MXU matmuls).
        mean = jnp.sum(partial_sums, axis=1) * inv_hw                          # (N, C, 1)
        hmid = jnp.maximum(jnp.einsum("rc,ncl->nrl", w1, mean) + b1[None], 0.0)
        c_gate = jax.nn.sigmoid(jnp.einsum("cr,nrl->ncl", w2, hmid) + b2[None])  # (N, C, 1)

        # Pass 2: elementwise sSE gate + combine, fully parallel lane-tiled grid.
        out3 = pl.pallas_call(
            _scse_apply_kernel,
            out_shape=jax.ShapeDtypeStruct((N, C, HWp), x3.dtype),
            grid=(N, n_tiles),
            in_specs=[
                pl.BlockSpec((pl.Squeezed(), C, hw_tile), lambda n, t: (n, 0, t)),  # x
                pl.BlockSpec((pl.Squeezed(), C, 1), lambda n, t: (n, 0, 0)),         # c_gate
                pl.BlockSpec((C, 1), lambda n, t: (0, 0)),                            # ws
                pl.BlockSpec((1, 1), lambda n, t: (0, 0)),                            # bs
            ],
            out_specs=pl.BlockSpec((pl.Squeezed(), C, hw_tile), lambda n, t: (n, 0, t)),
            compiler_params=pltpu.CompilerParams(
                dimension_semantics=("parallel", "parallel"),
                vmem_limit_bytes=vmem_limit,
            ),
        )(x3, c_gate, ws_col, bs)

    if HWp != HW:
        out3 = out3[:, :, :HW]
    return out3.reshape(N, C, H, W)


# --------------------------------------------------------------------------- reference ---


def scse_reference(x_nchw, params):
    """Plain-JAX reference matching the PyTorch module semantics."""
    w1, b1, w2, b2, ws, bs = (params[k] for k in ("w1", "b1", "w2", "b2", "ws", "bs"))
    N, C, H, W = x_nchw.shape
    x3 = x_nchw.reshape(N, C, H * W)
    mean = jnp.mean(x3, axis=2, keepdims=True)                        # (N, C, 1)
    h = jnp.maximum(jnp.einsum("rc,ncl->nrl", w1, mean) + b1[None], 0.0)
    c_gate = jax.nn.sigmoid(jnp.einsum("cr,nrl->ncl", w2, h) + b2[None])
    s_gate = jax.nn.sigmoid(jnp.einsum("oc,ncl->nol", ws, x3) + bs[None])
    out3 = x3 * c_gate + x3 * s_gate
    return out3.reshape(N, C, H, W)


def init_params(key, in_channels, reduction=16):
    cr = in_channels // reduction
    ks = jax.random.split(key, 6)
    scale = 0.1
    return {
        "w1": (scale * jax.random.normal(ks[0], (cr, in_channels))).astype(jnp.float32),
        "b1": (scale * jax.random.normal(ks[1], (cr, 1))).astype(jnp.float32),
        "w2": (scale * jax.random.normal(ks[2], (in_channels, cr))).astype(jnp.float32),
        "b2": (scale * jax.random.normal(ks[3], (in_channels, 1))).astype(jnp.float32),
        "ws": (scale * jax.random.normal(ks[4], (1, in_channels))).astype(jnp.float32),
        "bs": (scale * jax.random.normal(ks[5], (1, 1))).astype(jnp.float32),
    }


if __name__ == "__main__":
    # in_channels must be >= reduction for the PyTorch module to be valid.
    N, C, H, W = 2, 32, 16, 16
    reduction = 16

    key = jax.random.PRNGKey(0)
    kx, kp, kx2 = jax.random.split(key, 3)
    x = jax.random.normal(kx, (N, C, H, W), dtype=jnp.float32)
    params = init_params(kp, C, reduction)
    ref = scse_reference(x, params)

    # 1) Fused single-pass path (slab fits VMEM): x read from HBM once.
    out = jax.block_until_ready(scse_pallas(x, params))
    assert out.shape == (N, C, H, W)
    assert jnp.allclose(out, ref, atol=2e-5, rtol=2e-5), "Pallas mismatch (fused path)"

    # 2) Two-pass tiled path with a split reduction axis (large-slab code path).
    out2 = jax.block_until_ready(
        scse_pallas(x, params, hw_tile=128, force_two_pass=True, reduce_split=2)
    )
    assert jnp.allclose(out2, ref, atol=2e-5, rtol=2e-5), "Pallas mismatch (two-pass path)"

    # 3) HW not divisible by 128 -> lane-padding path (H=W=10, HW=100 padded to 128).
    xp = jax.random.normal(kx2, (N, C, 10, 10), dtype=jnp.float32)
    refp = scse_reference(xp, params)
    outp = jax.block_until_ready(scse_pallas(xp, params))
    assert outp.shape == (N, C, 10, 10)
    assert jnp.allclose(outp, refp, atol=2e-5, rtol=2e-5), "Pallas mismatch (padded HW)"

    print("KERNEL_OK")
</pallas_src>

<mosaic_0001>
module attributes {stable_mosaic.version = 11 : i64} {
  func.func @_scse_fused_kernel(%arg0: i32, %arg1: memref<1x32x256xf32, #tpu.memory_space<vmem>>, %arg2: memref<2x32xf32, #tpu.memory_space<vmem>>, %arg3: memref<2x1xf32, #tpu.memory_space<vmem>>, %arg4: memref<32x2xf32, #tpu.memory_space<vmem>>, %arg5: memref<32x1xf32, #tpu.memory_space<vmem>>, %arg6: memref<32x1xf32, #tpu.memory_space<vmem>>, %arg7: memref<1x1xf32, #tpu.memory_space<vmem>>, %arg8: memref<1x32x256xf32, #tpu.memory_space<vmem>>) attributes {dimension_semantics = [#tpu.dimension_semantics<parallel>], iteration_bounds = array<i64: 2>, scalar_prefetch = 0 : i64, scratch_operands = 0 : i64, tpu.core_type = #tpu.core_type<tc>, window_params = [{transform_indices = @transform_0, window_bounds = array<i64: 1, 32, 256>}, {pipeline_mode = #tpu.pipeline_mode<synchronous>, transform_indices = @transform_1, window_bounds = array<i64: 2, 32>}, {pipeline_mode = #tpu.pipeline_mode<synchronous>, transform_indices = @transform_2, window_bounds = array<i64: 2, 1>}, {pipeline_mode = #tpu.pipeline_mode<synchronous>, transform_indices = @transform_3, window_bounds = array<i64: 32, 2>}, {pipeline_mode = #tpu.pipeline_mode<synchronous>, transform_indices = @transform_4, window_bounds = array<i64: 32, 1>}, {pipeline_mode = #tpu.pipeline_mode<synchronous>, transform_indices = @transform_5, window_bounds = array<i64: 32, 1>}, {pipeline_mode = #tpu.pipeline_mode<synchronous>, transform_indices = @transform_6, window_bounds = array<i64: 1, 1>}, {transform_indices = @transform_7, window_bounds = array<i64: 1, 32, 256>}]} {
    %c0 = arith.constant 0 : index
    %c0_0 = arith.constant 0 : index
    %c0_1 = arith.constant 0 : index
    %0 = vector.load %arg1[%c0, %c0_0, %c0_1] : memref<1x32x256xf32, #tpu.memory_space<vmem>>, vector<1x32x256xf32>
    %1 = vector.shape_cast %0 : vector<1x32x256xf32> to vector<32x256xf32>
    %cst = arith.constant dense<0.000000e+00> : vector<32xf32>
    %2 = vector.multi_reduction <add>, %1, %cst [1] : vector<32x256xf32> to vector<32xf32>
    %3 = vector.shape_cast %2 : vector<32xf32> to vector<32x1xf32>
    %cst_2 = arith.constant 3.906250e-03 : f32
    %4 = vector.broadcast %cst_2 : f32 to vector<32x1xf32>
    %5 = arith.mulf %3, %4 : vector<32x1xf32>
    %c0_3 = arith.constant 0 : index
    %c0_4 = arith.constant 0 : index
    %6 = vector.load %arg2[%c0_3, %c0_4] : memref<2x32xf32, #tpu.memory_space<vmem>>, vector<2x32xf32>
    %cst_5 = arith.constant dense<0.000000e+00> : vector<2x1xf32>
    %7 = tpu.matmul %6, %5, %cst_5 {dimension_numbers = #tpu.dot_dimension_numbers<[1], [0], [0], [1], [0, 0, 1, 1], [], []>} : vector<2x32xf32>, vector<32x1xf32>, vector<2x1xf32> -> vector<2x1xf32>
    %c0_6 = arith.constant 0 : index
    %c0_7 = arith.constant 0 : index
    %8 = vector.load %arg3[%c0_6, %c0_7] : memref<2x1xf32, #tpu.memory_space<vmem>>, vector<2x1xf32>
    %9 = arith.addf %7, %8 : vector<2x1xf32>
    %cst_8 = arith.constant 0.000000e+00 : f32
    %10 = vector.broadcast %cst_8 : f32 to vector<2x1xf32>
    %11 = arith.maximumf %9, %10 : vector<2x1xf32>
    %c0_9 = arith.constant 0 : index
    %c0_10 = arith.constant 0 : index
    %12 = vector.load %arg4[%c0_9, %c0_10] : memref<32x2xf32, #tpu.memory_space<vmem>>, vector<32x2xf32>
    %cst_11 = arith.constant dense<0.000000e+00> : vector<32x1xf32>
    %13 = tpu.matmul %12, %11, %cst_11 {dimension_numbers = #tpu.dot_dimension_numbers<[1], [0], [0], [1], [0, 0, 1, 1], [], []>} : vector<32x2xf32>, vector<2x1xf32>, vector<32x1xf32> -> vector<32x1xf32>
    %c0_12 = arith.constant 0 : index
    %c0_13 = arith.constant 0 : index
    %14 = vector.load %arg5[%c0_12, %c0_13] : memref<32x1xf32, #tpu.memory_space<vmem>>, vector<32x1xf32>
    %15 = arith.addf %13, %14 : vector<32x1xf32>
    %16 = arith.negf %15 : vector<32x1xf32>
    %17 = math.exp %16 : vector<32x1xf32>
    %cst_14 = arith.constant 1.000000e+00 : f32
    %18 = vector.broadcast %cst_14 : f32 to vector<32x1xf32>
    %19 = arith.addf %18, %17 : vector<32x1xf32>
    %20 = arith.divf %18, %19 : vector<32x1xf32>
    %c0_15 = arith.constant 0 : index
    %c0_16 = arith.constant 0 : index
    %21 = vector.load %arg6[%c0_15, %c0_16] : memref<32x1xf32, #tpu.memory_space<vmem>>, vector<32x1xf32>
    %22 = vector.broadcast %21 : vector<32x1xf32> to vector<32x256xf32>
    %23 = arith.mulf %1, %22 : vector<32x256xf32>
    %cst_17 = arith.constant dense<0.000000e+00> : vector<256xf32>
    %24 = vector.multi_reduction <add>, %23, %cst_17 [0] : vector<32x256xf32> to vector<256xf32>
    %25 = vector.shape_cast %24 : vector<256xf32> to vector<1x256xf32>
    %c0_18 = arith.constant 0 : index
    %c0_19 = arith.constant 0 : index
    %26 = vector.load %arg7[%c0_18, %c0_19] : memref<1x1xf32, #tpu.memory_space<vmem>>, vector<1x1xf32>
    %27 = vector.broadcast %26 : vector<1x1xf32> to vector<1x256xf32>
    %28 = arith.addf %25, %27 : vector<1x256xf32>
    %29 = arith.negf %28 : vector<1x256xf32>
    %30 = math.exp %29 : vector<1x256xf32>
    %cst_20 = arith.constant 1.000000e+00 : f32
    %31 = vector.broadcast %cst_20 : f32 to vector<1x256xf32>
    %32 = arith.addf %31, %30 : vector<1x256xf32>
    %33 = arith.divf %31, %32 : vector<1x256xf32>
    %34 = vector.broadcast %20 : vector<32x1xf32> to vector<32x256xf32>
    %35 = vector.broadcast %33 : vector<1x256xf32> to vector<32x256xf32>
    %36 = arith.addf %34, %35 : vector<32x256xf32>
    %37 = arith.mulf %1, %36 : vector<32x256xf32>
    %c0_21 = arith.constant 0 : index
    %c0_22 = arith.constant 0 : index
    %c0_23 = arith.constant 0 : index
    %38 = vector.load %arg8[%c0_21, %c0_22, %c0_23] : memref<1x32x256xf32, #tpu.memory_space<vmem>>, vector<1x32x256xf32>
    %39 = vector.shape_cast %38 : vector<1x32x256xf32> to vector<32x256xf32>
    %40 = vector.shape_cast %37 : vector<32x256xf32> to vector<1x32x256xf32>
    tpu.vector_store %arg8[%c0_21, %c0_22, %c0_23], %40 {strides = array<i32>} : memref<1x32x256xf32, #tpu.memory_space<vmem>>, vector<1x32x256xf32>,
    return
  }
  func.func @transform_0(%arg0: i32) -> (i32, i32, i32) {
    %c0_i32 = arith.constant 0 : i32
    %c0_i32_0 = arith.constant 0 : i32
    %c0_i32_1 = arith.constant 0 : i32
    return %arg0, %c0_i32, %c0_i32_0 : i32, i32, i32
  }
  func.func @transform_1(%arg0: i32) -> (i32, i32) {
    %c0_i32 = arith.constant 0 : i32
    %c0_i32_0 = arith.constant 0 : i32
    %c0_i32_1 = arith.constant 0 : i32
    return %c0_i32, %c0_i32_0 : i32, i32
  }
  func.func @transform_2(%arg0: i32) -> (i32, i32) {
    %c0_i32 = arith.constant 0 : i32
    %c0_i32_0 = arith.constant 0 : i32
    %c0_i32_1 = arith.constant 0 : i32
    return %c0_i32, %c0_i32_0 : i32, i32
  }
  func.func @transform_3(%arg0: i32) -> (i32, i32) {
    %c0_i32 = arith.constant 0 : i32
    %c0_i32_0 = arith.constant 0 : i32
    %c0_i32_1 = arith.constant 0 : i32
    return %c0_i32, %c0_i32_0 : i32, i32
  }
  func.func @transform_4(%arg0: i32) -> (i32, i32) {
    %c0_i32 = arith.constant 0 : i32
    %c0_i32_0 = arith.constant 0 : i32
    %c0_i32_1 = arith.constant 0 : i32
    return %c0_i32, %c0_i32_0 : i32, i32
  }
  func.func @transform_5(%arg0: i32) -> (i32, i32) {
    %c0_i32 = arith.constant 0 : i32
    %c0_i32_0 = arith.constant 0 : i32
    %c0_i32_1 = arith.constant 0 : i32
    return %c0_i32, %c0_i32_0 : i32, i32
  }
  func.func @transform_6(%arg0: i32) -> (i32, i32) {
    %c0_i32 = arith.constant 0 : i32
    %c0_i32_0 = arith.constant 0 : i32
    %c0_i32_1 = arith.constant 0 : i32
    return %c0_i32, %c0_i32_0 : i32, i32
  }
  func.func @transform_7(%arg0: i32) -> (i32, i32, i32) {
    %c0_i32 = arith.constant 0 : i32
    %c0_i32_0 = arith.constant 0 : i32
    %c0_i32_1 = arith.constant 0 : i32
    return %arg0, %c0_i32, %c0_i32_0 : i32, i32, i32
  }
}

</mosaic_0001>

<llo_original>
// kernel: tpu_custom_call.1
$region0: #{tpu_custom_call.1}
  #allocation0 [shape = 'u32[]', space=smem, size = 0x4, offset = 0x4, fixed_abs, tag = 'smem constant byte address 0x4 - core index']
  #allocation1 [shape = 'u32[144,128]{1,0:T(1,128)}', space=vmem, size = 0x12000, scoped, tag = 'internal scratch']
  #allocation2 [shape = 'f32[1,1]{1,0:T(1,128)S(1)}', space=vmem, size = 0x200, scoped, tag = 'scoped memory for tpu_custom_call.1']
  %s0 = inlined_call_operand.hbm [shape: f32[2,32,256], index: 0, kind: input, shape index: {}]
  %s1 = inlined_call_operand.vmem [shape: f32[2,32], index: 1, kind: input, shape index: {}]
  %s2 = inlined_call_operand.vmem [shape: f32[2,1], index: 2, kind: input, shape index: {}]
  %s3 = inlined_call_operand.vmem [shape: f32[32,2], index: 3, kind: input, shape index: {}]
  %s4 = inlined_call_operand.vmem [shape: f32[32,1], index: 4, kind: input, shape index: {}]
  %s5 = inlined_call_operand.vmem [shape: f32[32,1], index: 5, kind: input, shape index: {}]
  %s6 = inlined_call_operand.<no memory space> [shape: f32[1,1], index: 6, kind: input, shape index: {}]
  %s7 = inlined_call_operand.hbm [shape: f32[2,32,256], index: 7, kind: output, shape index: {}]
  %s8 = sld [smem:[#allocation0]]
  $region65: #{tpu_custom_call.1} parent=0
    _
  %s10 = ssub.s32 1, %s8
  %s11 = scalar_select 0, %s10, %s8
  %v12 = vstv %s6
  %13 = vst [vmem:[#allocation2] sm:$0x1] %v12
  $region1: #{tpu_custom_call.1} parent=0
    #allocation3 [shape = 'u8[65536]{0}', space=vmem, size = 0x10000, scoped, tag = 'input window, operand 0']
    #allocation4 [shape = 's32[2]{0}', space=sflag, size = 0x8, scoped, tag = 'scoped memory for tpu_custom_call.1']
    #allocation5 [shape = 's32[2]{0}', space=sflag, size = 0x8, scoped, tag = 'scoped memory for tpu_custom_call.1']
    #allocation6 [shape = 'u8[65536]{0}', space=vmem, size = 0x10000, scoped, tag = 'output window, operand 0']
    %14 = vsyncpa [#allocation4], 0
    %s15 = scalar_lea.sflag [#allocation4], 1
    %16 = vsyncpa %s15, 0
    %17 = vsyncpa [#allocation5], 0
    %s18 = scalar_lea.sflag [#allocation5], 1
    %19 = vsyncpa %s18, 0
    loop: start=0, step=1, limit=4
    $region2: #{tpu_custom_call.1} parent=1 // loop_pre_header
      _
    $region3: #{tpu_custom_call.1} parent=1 // loop_header
      %s21 = sphi 0, %s25
      %p22 = scmp.ge.s32.totalorder %s21, 4
      %s31 = sphi 0, %s33
      %s34 = sphi 0, %s31
      %s35 = sphi 0, %s34
      %s51 = sphi 0, %s35
      %s55 = sphi 0, %s55
      %s57 = sphi 0, %s55
      %s58 = sphi 0, %s57
      %s72 = sphi 0, %s58
      %s76 = sphi 0, %s76
      %s78 = sphi 0, %s76
      %s79 = sphi 0, %s78
      %s93 = sphi 0, %s79
      %s97 = sphi 0, %s97
      %s99 = sphi 0, %s97
      %s100 = sphi 0, %s99
      %s114 = sphi 0, %s100
      %s118 = sphi 0, %s118
      %s120 = sphi 0, %s118
      %s121 = sphi 0, %s120
      %s135 = sphi 0, %s121
      %s139 = sphi 0, %s139
      %s141 = sphi 0, %s139
      %s142 = sphi 0, %s141
      %s156 = sphi 0, %s142
      %s160 = sphi 0, %s160
      %s162 = sphi 0, %s160
      %s163 = sphi 0, %s162
      %s177 = sphi 0, %s163
      %s183 = sphi 0, %s185
      %s186 = sphi 0, %s183
      %s187 = sphi 0, %s186
      %s203 = sphi 0, %s187
    $region4: #{tpu_custom_call.1} parent=1 // loop_header_branch
      %24 = sbr.rel (%p22) target = $region8
    $region5: #{tpu_custom_call.1} parent=1 // loop_body
      %s26 = ssub.s32 %s21, 1
      %s27 = ssub.s32 %s21, 2
      %s28 = sadd.s32 %s21, 1
      %s29 = ssub.s32 %s21, %s28
      %p30 = scmp.eq.s32.totalorder %s29, 0
      %s32 = sadd.s32 %s31, 1
      %s33 = scalar_select %p30, %s31, %s32
      %p36 = pneg %p30
      %p37 = scmp.eq.s32.totalorder %s21, 1
      %p38 = por %p36, %p37
      %p39 = scmp.ne.s32.totalorder %s31, %s34
      %p40 = scmp.eq.s32.totalorder %s21, 0
      %p41 = por %p39, %p40
      %p42 = scmp.ne.s32.totalorder %s31, %s34
      %p43 = scmp.eq.s32.totalorder %s26, 1
      %p44 = por %p42, %p43
      %p45 = scmp.ne.s32.totalorder %s34, %s35
      %p46 = scmp.eq.s32.totalorder %s26, 0
      %p47 = por %p45, %p46
      %p48 = scmp.ne.s32.totalorder %s34, %s35
      %p49 = scmp.eq.s32.totalorder %s27, 1
      %p50 = por %p48, %p49
      %p52 = scmp.ne.s32.totalorder %s35, %s51
      %p53 = scmp.eq.s32.totalorder %s27, 0
      %p54 = por %p52, %p53
      %s56 = sadd.s32 %s55, 1
      %p59 = scmp.eq.s32.totalorder %s21, 1
      %p60 = scmp.ne.s32.totalorder %s55, %s57
      %p61 = scmp.eq.s32.totalorder %s21, 0
      %p62 = por %p60, %p61
      %p63 = scmp.ne.s32.totalorder %s55, %s57
      %p64 = scmp.eq.s32.totalorder %s26, 1
      %p65 = por %p63, %p64
      %p66 = scmp.ne.s32.totalorder %s57, %s58
      %p67 = scmp.eq.s32.totalorder %s26, 0
      %p68 = por %p66, %p67
      %p69 = scmp.ne.s32.totalorder %s57, %s58
      %p70 = scmp.eq.s32.totalorder %s27, 1
      %p71 = por %p69, %p70
      %p73 = scmp.ne.s32.totalorder %s58, %s72
      %p74 = scmp.eq.s32.totalorder %s27, 0
      %p75 = por %p73, %p74
      %s77 = sadd.s32 %s76, 1
      %p80 = scmp.eq.s32.totalorder %s21, 1
      %p81 = scmp.ne.s32.totalorder %s76, %s78
      %p82 = scmp.eq.s32.totalorder %s21, 0
      %p83 = por %p81, %p82
      %p84 = scmp.ne.s32.totalorder %s76, %s78
      %p85 = scmp.eq.s32.totalorder %s26, 1
      %p86 = por %p84, %p85
      %p87 = scmp.ne.s32.totalorder %s78, %s79
      %p88 = scmp.eq.s32.totalorder %s26, 0
      %p89 = por %p87, %p88
      %p90 = scmp.ne.s32.totalorder %s78, %s79
      %p91 = scmp.eq.s32.totalorder %s27, 1
      %p92 = por %p90, %p91
      %p94 = scmp.ne.s32.totalorder %s79, %s93
      %p95 = scmp.eq.s32.totalorder %s27, 0
      %p96 = por %p94, %p95
      %s98 = sadd.s32 %s97, 1
      %p101 = scmp.eq.s32.totalorder %s21, 1
      %p102 = scmp.ne.s32.totalorder %s97, %s99
      %p103 = scmp.eq.s32.totalorder %s21, 0
      %p104 = por %p102, %p103
      %p105 = scmp.ne.s32.totalorder %s97, %s99
      %p106 = scmp.eq.s32.totalorder %s26, 1
      %p107 = por %p105, %p106
      %p108 = scmp.ne.s32.totalorder %s99, %s100
      %p109 = scmp.eq.s32.totalorder %s26, 0
      %p110 = por %p108, %p109
      %p111 = scmp.ne.s32.totalorder %s99, %s100
      %p112 = scmp.eq.s32.totalorder %s27, 1
      %p113 = por %p111, %p112
      %p115 = scmp.ne.s32.totalorder %s100, %s114
      %p116 = scmp.eq.s32.totalorder %s27, 0
      %p117 = por %p115, %p116
      %s119 = sadd.s32 %s118, 1
      %p122 = scmp.eq.s32.totalorder %s21, 1
      %p123 = scmp.ne.s32.totalorder %s118, %s120
      %p124 = scmp.eq.s32.totalorder %s21, 0
      %p125 = por %p123, %p124
      %p126 = scmp.ne.s32.totalorder %s118, %s120
      %p127 = scmp.eq.s32.totalorder %s26, 1
      %p128 = por %p126, %p127
      %p129 = scmp.ne.s32.totalorder %s120, %s121
      %p130 = scmp.eq.s32.totalorder %s26, 0
      %p131 = por %p129, %p130
      %p132 = scmp.ne.s32.totalorder %s120, %s121
      %p133 = scmp.eq.s32.totalorder %s27, 1
      %p134 = por %p132, %p133
      %p136 = scmp.ne.s32.totalorder %s121, %s135
      %p137 = scmp.eq.s32.totalorder %s27, 0
      %p138 = por %p136, %p137
      %s140 = sadd.s32 %s139, 1
      %p143 = scmp.eq.s32.totalorder %s21, 1
      %p144 = scmp.ne.s32.totalorder %s139, %s141
      %p145 = scmp.eq.s32.totalorder %s21, 0
      %p146 = por %p144, %p145
      %p147 = scmp.ne.s32.totalorder %s139, %s141
      %p148 = scmp.eq.s32.totalorder %s26, 1
      %p149 = por %p147, %p148
      %p150 = scmp.ne.s32.totalorder %s141, %s142
      %p151 = scmp.eq.s32.totalorder %s26, 0
      %p152 = por %p150, %p151
      %p153 = scmp.ne.s32.totalorder %s141, %s142
      %p154 = scmp.eq.s32.totalorder %s27, 1
      %p155 = por %p153, %p154
      %p157 = scmp.ne.s32.totalorder %s142, %s156
      %p158 = scmp.eq.s32.totalorder %s27, 0
      %p159 = por %p157, %p158
      %s161 = sadd.s32 %s160, 1
      %p164 = scmp.eq.s32.totalorder %s21, 1
      %p165 = scmp.ne.s32.totalorder %s160, %s162
      %p166 = scmp.eq.s32.totalorder %s21, 0
      %p167 = por %p165, %p166
      %p168 = scmp.ne.s32.totalorder %s160, %s162
      %p169 = scmp.eq.s32.totalorder %s26, 1
      %p170 = por %p168, %p169
      %p171 = scmp.ne.s32.totalorder %s162, %s163
      %p172 = scmp.eq.s32.totalorder %s26, 0
      %p173 = por %p171, %p172
      %p174 = scmp.ne.s32.totalorder %s162, %s163
      %p175 = scmp.eq.s32.totalorder %s27, 1
      %p176 = por %p174, %p175
      %p178 = scmp.ne.s32.totalorder %s163, %s177
      %p179 = scmp.eq.s32.totalorder %s27, 0
      %p180 = por %p178, %p179
      %s181 = ssub.s32 %s21, %s28
      %p182 = scmp.eq.s32.totalorder %s181, 0
      %s184 = sadd.s32 %s183, 1
      %s185 = scalar_select %p182, %s183, %s184
      %p188 = pneg %p182
      %p189 = scmp.eq.s32.totalorder %s21, 1
      %p190 = por %p188, %p189
      %p191 = scmp.ne.s32.totalorder %s183, %s186
      %p192 = scmp.eq.s32.totalorder %s21, 0
      %p193 = por %p191, %p192
      %p194 = scmp.ne.s32.totalorder %s183, %s186
      %p195 = scmp.eq.s32.totalorder %s26, 1
      %p196 = por %p194, %p195
      %p197 = scmp.ne.s32.totalorder %s186, %s187
      %p198 = scmp.eq.s32.totalorder %s26, 0
      %p199 = por %p197, %p198
      %p200 = scmp.ne.s32.totalorder %s186, %s187
      %p201 = scmp.eq.s32.totalorder %s27, 1
      %p202 = por %p200, %p201
      %p204 = scmp.ne.s32.totalorder %s187, %s203
      %p205 = scmp.eq.s32.totalorder %s27, 0
      %p206 = por %p204, %p205
      %p207 = scmp.le.s32.totalorder 1, %s21
      %p208 = scmp.lt.s32.totalorder %s21, 3
      %p209 = pnand %p207, %p208
      %p210 = pneg %p209
      // Predicated region
      $region9: #{tpu_custom_call.1} parent=5 // pred_check
        _
      $region10: #{tpu_custom_call.1} parent=5 // pred_check_branch
        %212 = sbr.rel (%p209) target = $region12
      $region11: #{tpu_custom_call.1} parent=5 // pred_region
        %s213 = ssub.s32 %s21, 1
        // Predicated region
        $region13: #{tpu_custom_call.1} parent=11 // pred_check
          %p214 = pneg %p68
        $region14: #{tpu_custom_call.1} parent=11 // pred_check_branch
          %216 = sbr.rel (%p214) target = $region16
        $region15: #{tpu_custom_call.1} parent=11 // pred_region
          _
        $region16: #{tpu_custom_call.1} parent=11 // pred_fallthru
          _
        // Predicated region
        $region17: #{tpu_custom_call.1} parent=11 // pred_check
          %p217 = pneg %p89
        $region18: #{tpu_custom_call.1} parent=11 // pred_check_branch
          %219 = sbr.rel (%p217) target = $region20
        $region19: #{tpu_custom_call.1} parent=11 // pred_region
          _
        $region20: #{tpu_custom_call.1} parent=11 // pred_fallthru
          _
        // Predicated region
        $region21: #{tpu_custom_call.1} parent=11 // pred_check
          %p220 = pneg %p110
        $region22: #{tpu_custom_call.1} parent=11 // pred_check_branch
          %222 = sbr.rel (%p220) target = $region24
        $region23: #{tpu_custom_call.1} parent=11 // pred_region
          _
        $region24: #{tpu_custom_call.1} parent=11 // pred_fallthru
          _
        // Predicated region
        $region25: #{tpu_custom_call.1} parent=11 // pred_check
          %p223 = pneg %p131
        $region26: #{tpu_custom_call.1} parent=11 // pred_check_branch
          %225 = sbr.rel (%p223) target = $region28
        $region27: #{tpu_custom_call.1} parent=11 // pred_region
          _
        $region28: #{tpu_custom_call.1} parent=11 // pred_fallthru
          _
        // Predicated region
        $region29: #{tpu_custom_call.1} parent=11 // pred_check
          %p226 = pneg %p152
        $region30: #{tpu_custom_call.1} parent=11 // pred_check_branch
          %228 = sbr.rel (%p226) target = $region32
        $region31: #{tpu_custom_call.1} parent=11 // pred_region
          _
        $region32: #{tpu_custom_call.1} parent=11 // pred_fallthru
          _
        // Predicated region
        $region33: #{tpu_custom_call.1} parent=11 // pred_check
          %p229 = pneg %p173
        $region34: #{tpu_custom_call.1} parent=11 // pred_check_branch
          %231 = sbr.rel (%p229) target = $region36
        $region35: #{tpu_custom_call.1} parent=11 // pred_region
          _
        $region36: #{tpu_custom_call.1} parent=11 // pred_fallthru
          _
      $region12: #{tpu_custom_call.1} parent=5 // pred_fallthru
        _
      %p232 = scmp.lt.s32.totalorder %s21, 2
      // Predicated region
      $region37: #{tpu_custom_call.1} parent=5 // pred_check
        %p233 = pneg %p232
      $region38: #{tpu_custom_call.1} parent=5 // pred_check_branch
        %235 = sbr.rel (%p233) target = $region40
      $region39: #{tpu_custom_call.1} parent=5 // pred_region
        // Predicated region
        $region41: #{tpu_custom_call.1} parent=39 // pred_check
          %p236 = pneg %p41
        $region42: #{tpu_custom_call.1} parent=39 // pred_check_branch
          %238 = sbr.rel (%p236) target = $region44
        $region43: #{tpu_custom_call.1} parent=39 // pred_region
          %s239 = sand.u32 %s31, 1
          %s240 = scalar_lea.sflag [#allocation4], %s239
          %s241 = sand.u32 %s31, 1
          %s242 = smul.addr %s241, 64
          %s243 = scalar_lea.vmem [#allocation3], %s242
          %s245 = ssub.s32 1024, 1024
          %246 = vsyncadd %s240, %s245
          %s247 = smul.addr %s21, 8
          %s248 = smul.addr %s247, 128
          %s249 = scalar_lea.hbm %s0, %s248
          %s250 = sshll.u32 %s243, 4
          %s251 = int_to_ptr.vmem [resolvable:$true] %s250
          %256 = dma.hbm_to_vmem [thread:$0]  %s249, 1024, %s251, %s240, 256, 256, 16
        $region44: #{tpu_custom_call.1} parent=39 // pred_fallthru
          _
      $region40: #{tpu_custom_call.1} parent=5 // pred_fallthru
        _
      %p257 = scmp.le.s32.totalorder 1, %s21
      %p258 = scmp.lt.s32.totalorder %s21, 3
      %p259 = pnand %p257, %p258
      %p260 = pneg %p259
      // Predicated region
      $region45: #{tpu_custom_call.1} parent=5 // pred_check
        _
      $region46: #{tpu_custom_call.1} parent=5 // pred_check_branch
        %262 = sbr.rel (%p259) target = $region48
      $region47: #{tpu_custom_call.1} parent=5 // pred_region
        %s263 = ssub.s32 %s21, 1
        %s264 = sand.u32 %s34, 1
        %s265 = scalar_lea.sflag [#allocation4], %s264
        %s266 = sand.u32 %s34, 1
        %s267 = smul.addr %s266, 64
        %s268 = scalar_lea.vmem [#allocation3], %s267
        // Predicated region
        $region49: #{tpu_custom_call.1} parent=47 // pred_check
          %p269 = pneg %p47
        $region50: #{tpu_custom_call.1} parent=47 // pred_check_branch
          %271 = sbr.rel (%p269) target = $region52
        $region51: #{tpu_custom_call.1} parent=47 // pred_region
          %272 = dma.done %s265, 1024
        $region52: #{tpu_custom_call.1} parent=47 // pred_fallthru
          _
        %s273 = sand.u32 %s34, 1
        %s274 = scalar_lea.sflag [#allocation4], %s273
        %s275 = sand.u32 %s34, 1
        %s276 = smul.addr %s275, 64
        %s277 = scalar_lea.vmem [#allocation3], %s276
        %p278 = pneg %p47
        %p279 = pneg %p44
        %p280 = pneg %p68
        %p281 = pneg %p65
        %p282 = pneg %p89
        %p283 = pneg %p86
        %p284 = pneg %p110
        %p285 = pneg %p107
        %p286 = pneg %p131
        %p287 = pneg %p128
        %p288 = pneg %p152
        %p289 = pneg %p149
        %p290 = pneg %p173
        %p291 = pneg %p170
        %p292 = pneg %p199
        %p293 = pneg %p196
        %s294 = sand.u32 %s186, 1
        %s295 = scalar_lea.sflag [#allocation5], %s294
        %s296 = sand.u32 %s186, 1
        %s297 = smul.addr %s296, 64
        %s298 = scalar_lea.vmem [#allocation6], %s297
        %v299 = vld [vmem:[%s268] sm:$0xff]
        %v300 = vld [vmem:[%s268 + $0x8] sm:$0xff]
        %v301 = vld [vmem:[%s268 + $0x10] sm:$0xff]
        %v302 = vld [vmem:[%s268 + $0x18] sm:$0xff]
        %v303 = vld [vmem:[%s268 + $0x20] sm:$0xff]
        %v304 = vld [vmem:[%s268 + $0x28] sm:$0xff]
        %v305 = vld [vmem:[%s268 + $0x30] sm:$0xff]
        %v306 = vld [vmem:[%s268 + $0x38] sm:$0xff]
        %v307 = vadd.f32 %v299, %v300
        %308 = vadd.xlane.f32.xlu0 %v307
        %v309 = vpop.xlane.xlu0 %308
        %v310 = vadd.f32 %v301, %v302
        %311 = vadd.xlane.f32.xlu0 %v310
        %v312 = vpop.xlane.xlu0 %311
        %v313 = vadd.f32 %v303, %v304
        %314 = vadd.xlane.f32.xlu0 %v313
        %v315 = vpop.xlane.xlu0 %314
        %v316 = vadd.f32 %v305, %v306
        %317 = vadd.xlane.f32.xlu0 %v316
        %v318 = vpop.xlane.xlu0 %317
        %v319 = vmul.f32 %v309, 0.00390625
        %v320 = vmul.f32 %v312, 0.00390625
        %v321 = vmul.f32 %v315, 0.00390625
        %v322 = vmul.f32 %v318, 0.00390625
        %v323 = vld [vmem:[%s1] sm:$0x3]
        %v324 = vld [vmem:[%s2] sm:$0x3]
        %vm325 = vcmask 261120
        %v327 = vsel %vm325, %v323, 0
        %329 = vmatprep.subr.mxu0 0.0
        %330 = vmatpush1.msra.mxu0 %v319
        %331 = vmatprep.subr.mxu0 0.0
        %332 = vmatpush1.msra.mxu0 %v320
        %333 = vmatprep.subr.mxu0 0.0
        %334 = vmatpush1.msra.mxu0 %v321
        %335 = vmatprep.subr.mxu0 0.0
        %336 = vmatpush1.msra.mxu0 %v322
        %337 = vmatprep.subr.mxu0 0.0
        %338 = vmatpush1.msra.mxu0 0.0
        %339 = vmatprep.subr.mxu0 0.0
        %340 = vmatpush1.msra.mxu0 0.0
        %341 = vmatprep.subr.mxu0 0.0
        %342 = vmatpush1.msra.mxu0 0.0
        %343 = vmatprep.subr.mxu0 0.0
        %344 = vmatpush1.msra.mxu0 0.0
        %345 = vmatprep.subr.mxu0 0.0
        %346 = vmatpush1.msra.mxu0 0.0
        %347 = vmatprep.subr.mxu0 0.0
        %348 = vmatpush1.msra.mxu0 0.0
        %349 = vmatprep.subr.mxu0 0.0
        %350 = vmatpush1.msra.mxu0 0.0
        %351 = vmatprep.subr.mxu0 0.0
        %352 = vmatpush1.msra.mxu0 0.0
        %353 = vmatprep.subr.mxu0 0.0
        %354 = vmatpush1.msra.mxu0 0.0
        %355 = vmatprep.subr.mxu0 0.0
        %356 = vmatpush1.msra.mxu0 0.0
        %357 = vmatprep.subr.mxu0 0.0
        %358 = vmatpush1.msra.mxu0 0.0
        %359 = vmatprep.subr.mxu0 0.0
        %360 = vmatpush1.msra.mxu0 0.0
        %361 = vmatprep.subr.mxu0 0.0
        %362 = vmatpush1.msra.mxu0 0.0
        %363 = vmatprep.subr.mxu0 0.0
        %364 = vmatpush1.msra.mxu0 0.0
        %365 = vmatprep.subr.mxu0 0.0
        %366 = vmatpush1.msra.mxu0 0.0
        %367 = vmatprep.subr.mxu0 0.0
        %368 = vmatpush1.msra.mxu0 0.0
        %369 = vmatprep.subr.mxu0 0.0
        %370 = vmatpush1.msra.mxu0 0.0
        %371 = vmatprep.subr.mxu0 0.0
        %372 = vmatpush1.msra.mxu0 0.0
        %373 = vmatprep.subr.mxu0 0.0
        %374 = vmatpush1.msra.mxu0 0.0
        %375 = vmatprep.subr.mxu0 0.0
        %376 = vmatpush1.msra.mxu0 0.0
        %377 = vmatprep.subr.mxu0 0.0
        %378 = vmatpush1.msra.mxu0 0.0
        %379 = vmatprep.subr.mxu0 0.0
        %380 = vmatpush1.msra.mxu0 0.0
        %381 = vmatprep.subr.mxu0 0.0
        %382 = vmatpush1.msra.mxu0 0.0
        %383 = vmatprep.subr.mxu0 0.0
        %384 = vmatpush1.msra.mxu0 0.0
        %385 = vmatprep.subr.mxu0 0.0
        %386 = vmatpush1.msra.mxu0 0.0
        %387 = vmatprep.subr.mxu0 0.0
        %388 = vmatpush1.msra.mxu0 0.0
        %389 = vmatprep.subr.mxu0 0.0
        %390 = vmatpush1.msra.mxu0 0.0
        %391 = vmatprep.subr.mxu0 0.0
        %392 = vmatpush1.msra.mxu0 0.0
        %393 = vmatprep.mubr.f32.mxu0 0.0
        %394 = vmatmul.mubr.f32.gmra.mrb[0].mxu0 %v327
        %v395 = vpop.f32.mrb[0].mxu0
        %v396 = vadd.f32 %v324, %v395
        %v397 = vpop.f32.mrb[0].mxu0
        %398 = vdwg.mxu0
        %v399 = vmax.f32 %v396, 0.0
        %v400 = vld [vmem:[%s3] sm:$0xff]
        %v401 = vld [vmem:[%s3 + $0x8] sm:$0xff]
        %v402 = vld [vmem:[%s3 + $0x10] sm:$0xff]
        %v403 = vld [vmem:[%s3 + $0x18] sm:$0xff]
        %v404 = vld [vmem:[%s4] sm:$0xff]
        %v405 = vld [vmem:[%s4 + $0x8] sm:$0xff]
        %v406 = vld [vmem:[%s4 + $0x10] sm:$0xff]
        %v407 = vld [vmem:[%s4 + $0x18] sm:$0xff]
        %vm408 = vcmask 15360
        %v410 = vsel %vm408, %v400, 0
        %v413 = vsel %vm408, %v401, 0
        %v416 = vsel %vm408, %v402, 0
        %v419 = vsel %vm408, %v403, 0
        %vm421 = vcmask 1041408
        %v423 = vsel %vm421, %v399, 0
        %425 = vmatprep.subr.mxu0 0.0
        %426 = vmatpush1.msra.mxu0 %v423
        %427 = vmatprep.subr.mxu0 0.0
        %428 = vmatpush1.msra.mxu0 0.0
        %429 = vmatprep.subr.mxu0 0.0
        %430 = vmatpush1.msra.mxu0 0.0
        %431 = vmatprep.subr.mxu0 0.0
        %432 = vmatpush1.msra.mxu0 0.0
        %433 = vmatprep.subr.mxu0 0.0
        %434 = vmatpush1.msra.mxu0 0.0
        %435 = vmatprep.subr.mxu0 0.0
        %436 = vmatpush1.msra.mxu0 0.0
        %437 = vmatprep.subr.mxu0 0.0
        %438 = vmatpush1.msra.mxu0 0.0
        %439 = vmatprep.subr.mxu0 0.0
        %440 = vmatpush1.msra.mxu0 0.0
        %441 = vmatprep.subr.mxu0 0.0
        %442 = vmatpush1.msra.mxu0 0.0
        %443 = vmatprep.subr.mxu0 0.0
        %444 = vmatpush1.msra.mxu0 0.0
        %445 = vmatprep.subr.mxu0 0.0
        %446 = vmatpush1.msra.mxu0 0.0
        %447 = vmatprep.subr.mxu0 0.0
        %448 = vmatpush1.msra.mxu0 0.0
        %449 = vmatprep.subr.mxu0 0.0
        %450 = vmatpush1.msra.mxu0 0.0
        %451 = vmatprep.subr.mxu0 0.0
        %452 = vmatpush1.msra.mxu0 0.0
        %453 = vmatprep.subr.mxu0 0.0
        %454 = vmatpush1.msra.mxu0 0.0
        %455 = vmatprep.subr.mxu0 0.0
        %456 = vmatpush1.msra.mxu0 0.0
        %457 = vmatprep.subr.mxu0 0.0
        %458 = vmatpush1.msra.mxu0 0.0
        %459 = vmatprep.subr.mxu0 0.0
        %460 = vmatpush1.msra.mxu0 0.0
        %461 = vmatprep.subr.mxu0 0.0
        %462 = vmatpush1.msra.mxu0 0.0
        %463 = vmatprep.subr.mxu0 0.0
        %464 = vmatpush1.msra.mxu0 0.0
        %465 = vmatprep.subr.mxu0 0.0
        %466 = vmatpush1.msra.mxu0 0.0
        %467 = vmatprep.subr.mxu0 0.0
        %468 = vmatpush1.msra.mxu0 0.0
        %469 = vmatprep.subr.mxu0 0.0
        %470 = vmatpush1.msra.mxu0 0.0
        %471 = vmatprep.subr.mxu0 0.0
        %472 = vmatpush1.msra.mxu0 0.0
        %473 = vmatprep.subr.mxu0 0.0
        %474 = vmatpush1.msra.mxu0 0.0
        %475 = vmatprep.subr.mxu0 0.0
        %476 = vmatpush1.msra.mxu0 0.0
        %477 = vmatprep.subr.mxu0 0.0
        %478 = vmatpush1.msra.mxu0 0.0
        %479 = vmatprep.subr.mxu0 0.0
        %480 = vmatpush1.msra.mxu0 0.0
        %481 = vmatprep.subr.mxu0 0.0
        %482 = vmatpush1.msra.mxu0 0.0
        %483 = vmatprep.subr.mxu0 0.0
        %484 = vmatpush1.msra.mxu0 0.0
        %485 = vmatprep.subr.mxu0 0.0
        %486 = vmatpush1.msra.mxu0 0.0
        %487 = vmatprep.subr.mxu0 0.0
        %488 = vmatpush1.msra.mxu0 0.0
        %489 = vmatprep.mubr.f32.mxu0 0.0
        %490 = vmatmul.mubr.f32.gmra.mrb[0].mxu0 %v410
        %v491 = vpop.f32.mrb[0].mxu0
        %v492 = vadd.f32 %v404, %v491
        %v493 = vpop.f32.mrb[0].mxu0
        %494 = vmatprep.mubr.f32.mxu0 0.0
        %495 = vmatmul.mubr.f32.gmra.mrb[0].mxu0 %v413
        %v496 = vpop.f32.mrb[0].mxu0
        %v497 = vadd.f32 %v405, %v496
        %v498 = vpop.f32.mrb[0].mxu0
        %499 = vmatprep.mubr.f32.mxu0 0.0
        %500 = vmatmul.mubr.f32.gmra.mrb[0].mxu0 %v416
        %v501 = vpop.f32.mrb[0].mxu0
        %v502 = vadd.f32 %v406, %v501
        %v503 = vpop.f32.mrb[0].mxu0
        %504 = vmatprep.mubr.f32.mxu0 0.0
        %505 = vmatmul.mubr.f32.gmra.mrb[0].mxu0 %v419
        %v506 = vpop.f32.mrb[0].mxu0
        %v507 = vadd.f32 %v407, %v506
        %v508 = vpop.f32.mrb[0].mxu0
        %509 = vdwg.mxu0
        %v510 = vxor.u32 %v492, 2147483648
        %v511 = vxor.u32 %v497, 2147483648
        %v512 = vxor.u32 %v502, 2147483648
        %v513 = vxor.u32 %v507, 2147483648
        %v514 = vmul.f32 %v510, 1.442695
        %v515 = vpow.pop %v514
        %v516 = vmul.f32 %v511, 1.442695
        %v517 = vpow.pop %v516
        %v518 = vmul.f32 %v512, 1.442695
        %v519 = vpow.pop %v518
        %v520 = vmul.f32 %v513, 1.442695
        %v521 = vpow.pop %v520
        %v522 = vadd.f32 %v515, 1.0
        %v523 = vadd.f32 %v517, 1.0
        %v524 = vadd.f32 %v519, 1.0
        %v525 = vadd.f32 %v521, 1.0
        %v526 = vrcp.pop %v522
        %v527 = vmul.f32 1.0, %v526
        %v528 = vrcp.pop %v523
        %v529 = vmul.f32 1.0, %v528
        %v530 = vrcp.pop %v524
        %v531 = vmul.f32 1.0, %v530
        %v532 = vrcp.pop %v525
        %v533 = vmul.f32 1.0, %v532
        %v534 = vld [vmem:[%s5] sm:$0xff]
        %v535 = vld [vmem:[%s5 + $0x8] sm:$0xff]
        %v536 = vld [vmem:[%s5 + $0x10] sm:$0xff]
        %v537 = vld [vmem:[%s5 + $0x18] sm:$0xff]
        %539 = vset.pattern.permute.xlu0 0
        %540 = vperm.xlu0 %539, %v534
        %v541 = vpop.permute.xlu0 %540
        %544 = vset.pattern.permute.xlu0 0
        %545 = vperm.xlu0 %544, %v535
        %v546 = vpop.permute.xlu0 %545
        %549 = vset.pattern.permute.xlu0 0
        %550 = vperm.xlu0 %549, %v536
        %v551 = vpop.permute.xlu0 %550
        %554 = vset.pattern.permute.xlu0 0
        %555 = vperm.xlu0 %554, %v537
        %v556 = vpop.permute.xlu0 %555
        %v558 = vmul.f32 %v299, %v541
        %v559 = vmul.f32 %v300, %v541
        %v560 = vmul.f32 %v301, %v546
        %v561 = vmul.f32 %v302, %v546
        %v562 = vmul.f32 %v303, %v551
        %v563 = vmul.f32 %v304, %v551
        %v564 = vmul.f32 %v305, %v556
        %v565 = vmul.f32 %v306, %v556
        %v566 = vadd.f32 %v558, %v560
        %v567 = vadd.f32 %v566, %v562
        %v568 = vadd.f32 %v567, %v564
        %v569 = vrot.slane %v568, 4
        %v570 = vadd.f32 %v568, %v569
        %v571 = vrot.slane %v570, 2
        %v572 = vadd.f32 %v570, %v571
        %v573 = vrot.slane %v572, 1
        %v574 = vadd.f32 %v572, %v573
        %v575 = vadd.f32 %v559, %v561
        %v576 = vadd.f32 %v575, %v563
        %v577 = vadd.f32 %v576, %v565
        %v578 = vrot.slane %v577, 4
        %v579 = vadd.f32 %v577, %v578
        %v580 = vrot.slane %v579, 2
        %v581 = vadd.f32 %v579, %v580
        %v582 = vrot.slane %v581, 1
        %v583 = vadd.f32 %v581, %v582
        %v584 = vld [vmem:[#allocation2] sm:$0x1]
        %586 = vset.pattern.permute.xlu0 0
        %587 = vperm.xlu0 %586, %v584
        %v588 = vpop.permute.xlu0 %587
        %v590 = vlaneseq
        %v591 = vshrl.u32 %v590, 7
        %v592 = vsub.s32 0, %v591
        %v593 = vrot.slane %v588, %v592
        %v594 = vadd.f32 %v574, %v593
        %v595 = vadd.f32 %v583, %v593
        %v596 = vxor.u32 %v594, 2147483648
        %v597 = vxor.u32 %v595, 2147483648
        %v598 = vmul.f32 %v596, 1.442695
        %v599 = vpow.pop %v598
        %v600 = vmul.f32 %v597, 1.442695
        %v601 = vpow.pop %v600
        %v602 = vadd.f32 %v599, 1.0
        %v603 = vadd.f32 %v601, 1.0
        %v604 = vrcp.pop %v602
        %v605 = vmul.f32 1.0, %v604
        %v606 = vrcp.pop %v603
        %v607 = vmul.f32 1.0, %v606
        %609 = vset.pattern.permute.xlu0 0
        %610 = vperm.xlu0 %609, %v527
        %v611 = vpop.permute.xlu0 %610
        %614 = vset.pattern.permute.xlu0 0
        %615 = vperm.xlu0 %614, %v529
        %v616 = vpop.permute.xlu0 %615
        %619 = vset.pattern.permute.xlu0 0
        %620 = vperm.xlu0 %619, %v531
        %v621 = vpop.permute.xlu0 %620
        %624 = vset.pattern.permute.xlu0 0
        %625 = vperm.xlu0 %624, %v533
        %v626 = vpop.permute.xlu0 %625
        %v628 = vadd.f32 %v611, %v605
        %v629 = vadd.f32 %v611, %v607
        %v630 = vadd.f32 %v616, %v605
        %v631 = vadd.f32 %v616, %v607
        %v632 = vadd.f32 %v621, %v605
        %v633 = vadd.f32 %v621, %v607
        %v634 = vadd.f32 %v626, %v605
        %v635 = vadd.f32 %v626, %v607
        %v636 = vmul.f32 %v299, %v628
        %v637 = vmul.f32 %v300, %v629
        %v638 = vmul.f32 %v301, %v630
        %v639 = vmul.f32 %v302, %v631
        %v640 = vmul.f32 %v303, %v632
        %v641 = vmul.f32 %v304, %v633
        %v642 = vmul.f32 %v305, %v634
        %v643 = vmul.f32 %v306, %v635
        %644 = vst [vmem:[%s298] sm:$0xff] %v636
        %645 = vst [vmem:[%s298 + $0x8] sm:$0xff] %v637
        %646 = vst [vmem:[%s298 + $0x10] sm:$0xff] %v638
        %647 = vst [vmem:[%s298 + $0x18] sm:$0xff] %v639
        %648 = vst [vmem:[%s298 + $0x20] sm:$0xff] %v640
        %649 = vst [vmem:[%s298 + $0x28] sm:$0xff] %v641
        %650 = vst [vmem:[%s298 + $0x30] sm:$0xff] %v642
        %651 = vst [vmem:[%s298 + $0x38] sm:$0xff] %v643
        %s652 = sand.u32 %s186, 1
        %s653 = scalar_lea.sflag [#allocation5], %s652
        %s654 = sand.u32 %s186, 1
        %s655 = smul.addr %s654, 64
        %s656 = scalar_lea.vmem [#allocation6], %s655
        // Predicated region
        $region53: #{tpu_custom_call.1} parent=47 // pred_check
          %p657 = pneg %p196
        $region54: #{tpu_custom_call.1} parent=47 // pred_check_branch
          %659 = sbr.rel (%p657) target = $region56
        $region55: #{tpu_custom_call.1} parent=47 // pred_region
          %s661 = ssub.s32 1024, 1024
          %662 = vsyncadd %s653, %s661
          %s663 = smul.addr %s26, 8
          %s664 = smul.addr %s663, 128
          %s665 = scalar_lea.hbm %s7, %s664
          %s666 = sshll.u32 %s656, 4
          %s667 = int_to_ptr.vmem [resolvable:$true] %s666
          %672 = dma.vmem_to_hbm [thread:$0]  %s667, 1024, %s665, %s653, 256, 256, 16
        $region56: #{tpu_custom_call.1} parent=47 // pred_fallthru
          _
      $region48: #{tpu_custom_call.1} parent=5 // pred_fallthru
        _
      %p673 = scmp.le.s32.totalorder 2, %s21
      // Predicated region
      $region57: #{tpu_custom_call.1} parent=5 // pred_check
        %p674 = pneg %p673
      $region58: #{tpu_custom_call.1} parent=5 // pred_check_branch
        %676 = sbr.rel (%p674) target = $region60
      $region59: #{tpu_custom_call.1} parent=5 // pred_region
        %s677 = ssub.s32 %s21, 2
        // Predicated region
        $region61: #{tpu_custom_call.1} parent=59 // pred_check
          %p678 = pneg %p202
        $region62: #{tpu_custom_call.1} parent=59 // pred_check_branch
          %680 = sbr.rel (%p678) target = $region64
        $region63: #{tpu_custom_call.1} parent=59 // pred_region
          %s681 = sand.u32 %s187, 1
          %s682 = scalar_lea.sflag [#allocation5], %s681
          %s683 = sand.u32 %s187, 1
          %s684 = smul.addr %s683, 64
          %s685 = scalar_lea.vmem [#allocation6], %s684
          %686 = dma.done %s682, 1024
        $region64: #{tpu_custom_call.1} parent=59 // pred_fallthru
          _
      $region60: #{tpu_custom_call.1} parent=5 // pred_fallthru
        _
    $region6: #{tpu_custom_call.1} parent=1 // loop_footer
      %s25 = sadd.s32 1, %s21
    $region7: #{tpu_custom_call.1} parent=1 // loop_footer_branch
      %20 = sbr.rel target = $region3
    $region8: #{tpu_custom_call.1} parent=1 // loop_exit
      _
    %687 = vsyncpa [#allocation4], 1
    %s688 = scalar_lea.sflag [#allocation4], 1
    %689 = vsyncpa %s688, 1
    %690 = vsyncpa [#allocation5], 1
    %s691 = scalar_lea.sflag [#allocation5], 1
    %692 = vsyncpa %s691, 1

</llo_original>
